<compile_context>
chip_gen: v6e
topology: v6e:2x2x1
jax: 0.10.0
libtpu: 0.0.40
codegen_flags: <defaults>
</compile_context>

<pallas_src>
import jax
import jax.numpy as jnp
from jax.experimental import pallas as pl
from jax.experimental.pallas import tpu as pltpu

_LANES = 128  # samples packed per sublane-row of the reshaped problem


def _linear_kernel(b_ref, x_ref, w_ref, o_ref):
    # b_ref: (out_f,)                  in SMEM (flat, no padding)
    # x_ref: (rows_tile, 128*in_f)     VMEM: 128 samples/row, features interleaved
    # w_ref: (128*in_f, 128*out_f)     VMEM: block-diagonal kron(I_128, W^T)
    # o_ref: (rows_tile, 128*out_f)    VMEM: lane- and sublane-dense output
    acc = jnp.dot(
        x_ref[...].astype(jnp.float32),
        w_ref[...],
        precision=jax.lax.Precision.HIGHEST,
        preferred_element_type=jnp.float32,
    )
    out_f = b_ref.shape[0]
    if out_f == 1:
        acc = acc + b_ref[0]
    else:  # general case: lane c maps to output feature c % out_f
        lane = jax.lax.broadcasted_iota(jnp.int32, acc.shape, 1)
        for o in range(out_f):
            acc = jnp.where(lane % out_f == o, acc + b_ref[o], acc)
    o_ref[...] = acc.astype(o_ref.dtype)


def line_forward(x, weight, bias, *, max_rows_per_step=2048):
    """Pallas equivalent of Line.forward: nn.Linear(in_f, out_f)(x).

    x:      (N, in_features)
    weight: (out_features, in_features)
    bias:   (out_features,)
    returns (N, out_features)
    """
    n, in_f = x.shape
    out_f = weight.shape[0]

    # --- grid / tiling: single step for small N, >=2 parallel steps for huge N ---
    rows = pl.cdiv(n, _LANES)                      # 128 samples per row
    num_steps = pl.cdiv(rows, max_rows_per_step)
    if num_steps == 1:
        rows_tile = rows                           # full-dim block (no 8-mult needed)
    else:
        rows_tile = pl.cdiv(pl.cdiv(rows, num_steps), 8) * 8
    rows_pad = rows_tile * num_steps
    n_pad = rows_pad * _LANES

    # --- free / cheap layout plumbing in plain JAX (no transpose pass) ---
    xp = x if n_pad == n else jnp.pad(x, ((0, n_pad - n), (0, 0)))
    x2d = xp.reshape(rows_pad, _LANES * in_f)      # row-major => free reshape

    # Block-diagonal "de-interleaving" weight: (128*in_f, 128*out_f), ~128 KB.
    w_big = jnp.kron(jnp.eye(_LANES, dtype=jnp.float32),
                     weight.T.astype(jnp.float32))
    bias_flat = bias.reshape(out_f).astype(jnp.float32)

    bytes_accessed = (x2d.size * x2d.dtype.itemsize
                      + w_big.size * 4
                      + rows_pad * _LANES * out_f * x.dtype.itemsize)

    out2d = pl.pallas_call(
        _linear_kernel,
        out_shape=jax.ShapeDtypeStruct((rows_pad, _LANES * out_f), x.dtype),
        grid=(num_steps,),
        in_specs=[
            pl.BlockSpec(memory_space=pltpu.MemorySpace.SMEM),                # bias
            pl.BlockSpec((rows_tile, _LANES * in_f), lambda i: (i, 0)),       # x2d
            pl.BlockSpec((_LANES * in_f, _LANES * out_f), lambda i: (0, 0)),  # w_big
        ],
        out_specs=pl.BlockSpec((rows_tile, _LANES * out_f), lambda i: (i, 0)),
        compiler_params=pltpu.CompilerParams(
            dimension_semantics=("parallel",),
        ),
        cost_estimate=pl.CostEstimate(
            flops=2 * rows_pad * (_LANES * out_f) * (_LANES * in_f),
            transcendentals=0,
            bytes_accessed=bytes_accessed,
        ),
    )(bias_flat, x2d, w_big)

    # Back to the PyTorch nn.Linear layout (N, out_features): free reshape + tail slice.
    out = out2d.reshape(rows_pad * _LANES, out_f)
    return out[:n] if n_pad != n else out


if __name__ == "__main__":
    key = jax.random.PRNGKey(0)
    kx, kw, kb = jax.random.split(key, 3)

    # Shapes implied by the module: 1000 samples of 2 features -> 1 output.
    n, in_features, out_features = 1000, 2, 1
    x = jax.random.normal(kx, (n, in_features), dtype=jnp.float32)

    # Deterministic init (mimics nn.Linear's uniform(-1/sqrt(fan_in), 1/sqrt(fan_in))).
    bound = 1.0 / (in_features ** 0.5)
    weight = jax.random.uniform(kw, (out_features, in_features),
                                minval=-bound, maxval=bound, dtype=jnp.float32)
    bias = jax.random.uniform(kb, (out_features,),
                              minval=-bound, maxval=bound, dtype=jnp.float32)

    out = jax.block_until_ready(line_forward(x, weight, bias))

    # Reference check in plain JAX.
    ref = x @ weight.T + bias
    assert out.shape == (n, out_features)
    assert jnp.allclose(out, ref, atol=1e-4, rtol=1e-4), \
        float(jnp.max(jnp.abs(out - ref)))

    print("KERNEL_OK")
</pallas_src>

<mosaic_0001>
module attributes {stable_mosaic.version = 11 : i64} {
  func.func @_linear_kernel(%arg0: i32, %arg1: memref<1xf32, #tpu.memory_space<smem>>, %arg2: memref<8x256xf32, #tpu.memory_space<vmem>>, %arg3: memref<256x128xf32, #tpu.memory_space<vmem>>, %arg4: memref<8x128xf32, #tpu.memory_space<vmem>>) attributes {dimension_semantics = [#tpu.dimension_semantics<parallel>], iteration_bounds = array<i64: 1>, scalar_prefetch = 0 : i64, scratch_operands = 0 : i64, tpu.core_type = #tpu.core_type<tc>, window_params = [{transform_indices = @transform_0, window_bounds = array<i64: 1>}, {transform_indices = @transform_1, window_bounds = array<i64: 8, 256>}, {pipeline_mode = #tpu.pipeline_mode<synchronous>, transform_indices = @transform_2, window_bounds = array<i64: 256, 128>}, {transform_indices = @transform_3, window_bounds = array<i64: 8, 128>}]} {
    %c0 = arith.constant 0 : index
    %c0_0 = arith.constant 0 : index
    %0 = vector.load %arg2[%c0, %c0_0] : memref<8x256xf32, #tpu.memory_space<vmem>>, vector<8x256xf32>
    %c0_1 = arith.constant 0 : index
    %c0_2 = arith.constant 0 : index
    %1 = vector.load %arg3[%c0_1, %c0_2] : memref<256x128xf32, #tpu.memory_space<vmem>>, vector<256x128xf32>
    %cst = arith.constant dense<0.000000e+00> : vector<8x128xf32>
    %2 = tpu.matmul %0, %1, %cst {dimension_numbers = #tpu.dot_dimension_numbers<[1], [0], [0], [1], [0, 0, 1, 1], [], []>, precision = #tpu.contract_precision<fp32>} : vector<8x256xf32>, vector<256x128xf32>, vector<8x128xf32> -> vector<8x128xf32>
    %c0_3 = arith.constant 0 : index
    %3 = memref.load %arg1[%c0_3] : memref<1xf32, #tpu.memory_space<smem>>
    %4 = vector.broadcast %3 : f32 to vector<8x128xf32>
    %5 = arith.addf %2, %4 : vector<8x128xf32>
    %c0_4 = arith.constant 0 : index
    %c0_5 = arith.constant 0 : index
    %6 = vector.load %arg4[%c0_4, %c0_5] : memref<8x128xf32, #tpu.memory_space<vmem>>, vector<8x128xf32>
    tpu.vector_store %arg4[%c0_4, %c0_5], %5 {strides = array<i32>} : memref<8x128xf32, #tpu.memory_space<vmem>>, vector<8x128xf32>,
    return
  }
  func.func @transform_0(%arg0: i32) -> i32 {
    %c0_i32 = arith.constant 0 : i32
    %c0_i32_0 = arith.constant 0 : i32
    return %c0_i32 : i32
  }
  func.func @transform_1(%arg0: i32) -> (i32, i32) {
    %c0_i32 = arith.constant 0 : i32
    %c0_i32_0 = arith.constant 0 : i32
    return %arg0, %c0_i32 : i32, i32
  }
  func.func @transform_2(%arg0: i32) -> (i32, i32) {
    %c0_i32 = arith.constant 0 : i32
    %c0_i32_0 = arith.constant 0 : i32
    %c0_i32_1 = arith.constant 0 : i32
    return %c0_i32, %c0_i32_0 : i32, i32
  }
  func.func @transform_3(%arg0: i32) -> (i32, i32) {
    %c0_i32 = arith.constant 0 : i32
    %c0_i32_0 = arith.constant 0 : i32
    return %arg0, %c0_i32 : i32, i32
  }
}

</mosaic_0001>

<llo_original>
// kernel: tpu_custom_call.1
$region0: #{tpu_custom_call.1}
  #allocation0 [shape = 'u32[]', space=smem, size = 0x4, offset = 0x4, fixed_abs, tag = 'smem constant byte address 0x4 - core index']
  #allocation1 [shape = 'u32[144,128]{1,0:T(1,128)}', space=vmem, size = 0x12000, scoped, tag = 'internal scratch']
  #allocation2 [shape = 'f32[1]{0:T(128)S(6)}', space=smem, size = 0x200, scoped, tag = 'scoped memory for tpu_custom_call.1']
  %s0 = inlined_call_operand.<no memory space> [shape: f32[1], index: 0, kind: input, shape index: {}]
  %s1 = inlined_call_operand.hbm [shape: f32[8,256], index: 1, kind: input, shape index: {}]
  %s2 = inlined_call_operand.hbm [shape: f32[256,128], index: 2, kind: input, shape index: {}]
  %s3 = inlined_call_operand.hbm [shape: f32[8,128], index: 3, kind: output, shape index: {}]
  %s4 = sld [smem:[#allocation0]]
  $region30: #{tpu_custom_call.1} parent=0
    _
  %s6 = ssub.s32 1, %s4
  %s7 = scalar_select 0, %s6, %s4
  %8 = sst [smem:[#allocation2]] %s0
  $region1: #{tpu_custom_call.1} parent=0
    #allocation3 [shape = 'u8[8192]{0}', space=vmem, size = 0x2000, scoped, tag = 'input window, operand 1, single buffered']
    #allocation4 [shape = 's32[1]{0}', space=sflag, size = 0x4, scoped, tag = 'scoped memory for tpu_custom_call.1']
    #allocation5 [shape = 's32[1]{0}', space=sflag, size = 0x4, scoped, tag = 'scoped memory for tpu_custom_call.1']
    #allocation6 [shape = 'u8[131072]{0}', space=vmem, size = 0x20000, scoped, tag = 'input window, operand 2, single buffered']
    #allocation7 [shape = 's32[1]{0}', space=sflag, size = 0x4, scoped, tag = 'scoped memory for tpu_custom_call.1']
    #allocation8 [shape = 'u8[4096]{0}', space=vmem, size = 0x1000, scoped, tag = 'output window, operand 0, single buffered']
    %9 = vsyncpa [#allocation4], 0
    %10 = vsyncpa [#allocation7], 0
    %11 = vsyncpa [#allocation5], 0
    // Predicated region
    $region2: #{tpu_custom_call.1} parent=1 // pred_check
      _
    $region3: #{tpu_custom_call.1} parent=1 // pred_check_branch
      %13 = sbr.rel (0) target = $region5
    $region4: #{tpu_custom_call.1} parent=1 // pred_region
      _
    $region5: #{tpu_custom_call.1} parent=1 // pred_fallthru
      _
    // Predicated region
    $region6: #{tpu_custom_call.1} parent=1 // pred_check
      _
    $region7: #{tpu_custom_call.1} parent=1 // pred_check_branch
      %15 = sbr.rel (0) target = $region9
    $region8: #{tpu_custom_call.1} parent=1 // pred_region
      %s17 = ssub.s32 256, 256
      %18 = vsyncadd [#allocation4], %s17
      %s20 = sshll.u32 [#allocation3], 4
      %s21 = int_to_ptr.vmem [resolvable:$true] %s20
      %23 = dma.hbm_to_vmem [thread:$0]  %s1, 256, %s21, [#allocation4]
    $region9: #{tpu_custom_call.1} parent=1 // pred_fallthru
      _
    // Predicated region
    $region10: #{tpu_custom_call.1} parent=1 // pred_check
      _
    $region11: #{tpu_custom_call.1} parent=1 // pred_check_branch
      %25 = sbr.rel (0) target = $region13
    $region12: #{tpu_custom_call.1} parent=1 // pred_region
      %s27 = ssub.s32 4096, 4096
      %28 = vsyncadd [#allocation7], %s27
      %s29 = sshll.u32 [#allocation6], 4
      %s30 = int_to_ptr.vmem [resolvable:$true] %s29
      %35 = dma.hbm_to_vmem [thread:$0]  %s2, 4096, %s30, [#allocation7], 128, 128, 8
    $region13: #{tpu_custom_call.1} parent=1 // pred_fallthru
      _
    // Predicated region
    $region14: #{tpu_custom_call.1} parent=1 // pred_check
      _
    $region15: #{tpu_custom_call.1} parent=1 // pred_check_branch
      %37 = sbr.rel (0) target = $region17
    $region16: #{tpu_custom_call.1} parent=1 // pred_region
      %38 = dma.done [#allocation4], 256
    $region17: #{tpu_custom_call.1} parent=1 // pred_fallthru
      _
    // Predicated region
    $region18: #{tpu_custom_call.1} parent=1 // pred_check
      _
    $region19: #{tpu_custom_call.1} parent=1 // pred_check_branch
      %40 = sbr.rel (0) target = $region21
    $region20: #{tpu_custom_call.1} parent=1 // pred_region
      %41 = dma.done [#allocation7], 4096
    $region21: #{tpu_custom_call.1} parent=1 // pred_fallthru
      _
    %v42 = vld [vmem:[#allocation3] sm:$0xff]
    %v43 = vld [vmem:[#allocation3 + $0x8] sm:$0xff]
    %v44 = vld [vmem:[#allocation6] sm:$0xff]
    %v45 = vld [vmem:[#allocation6 + $0x8] sm:$0xff]
    %v46 = vld [vmem:[#allocation6 + $0x10] sm:$0xff]
    %v47 = vld [vmem:[#allocation6 + $0x18] sm:$0xff]
    %v48 = vld [vmem:[#allocation6 + $0x20] sm:$0xff]
    %v49 = vld [vmem:[#allocation6 + $0x28] sm:$0xff]
    %v50 = vld [vmem:[#allocation6 + $0x30] sm:$0xff]
    %v51 = vld [vmem:[#allocation6 + $0x38] sm:$0xff]
    %v52 = vld [vmem:[#allocation6 + $0x40] sm:$0xff]
    %v53 = vld [vmem:[#allocation6 + $0x48] sm:$0xff]
    %v54 = vld [vmem:[#allocation6 + $0x50] sm:$0xff]
    %v55 = vld [vmem:[#allocation6 + $0x58] sm:$0xff]
    %v56 = vld [vmem:[#allocation6 + $0x60] sm:$0xff]
    %v57 = vld [vmem:[#allocation6 + $0x68] sm:$0xff]
    %v58 = vld [vmem:[#allocation6 + $0x70] sm:$0xff]
    %v59 = vld [vmem:[#allocation6 + $0x78] sm:$0xff]
    %v60 = vld [vmem:[#allocation6 + $0x80] sm:$0xff]
    %v61 = vld [vmem:[#allocation6 + $0x88] sm:$0xff]
    %v62 = vld [vmem:[#allocation6 + $0x90] sm:$0xff]
    %v63 = vld [vmem:[#allocation6 + $0x98] sm:$0xff]
    %v64 = vld [vmem:[#allocation6 + $0xa0] sm:$0xff]
    %v65 = vld [vmem:[#allocation6 + $0xa8] sm:$0xff]
    %v66 = vld [vmem:[#allocation6 + $0xb0] sm:$0xff]
    %v67 = vld [vmem:[#allocation6 + $0xb8] sm:$0xff]
    %v68 = vld [vmem:[#allocation6 + $0xc0] sm:$0xff]
    %v69 = vld [vmem:[#allocation6 + $0xc8] sm:$0xff]
    %v70 = vld [vmem:[#allocation6 + $0xd0] sm:$0xff]
    %v71 = vld [vmem:[#allocation6 + $0xd8] sm:$0xff]
    %v72 = vld [vmem:[#allocation6 + $0xe0] sm:$0xff]
    %v73 = vld [vmem:[#allocation6 + $0xe8] sm:$0xff]
    %v74 = vld [vmem:[#allocation6 + $0xf0] sm:$0xff]
    %v75 = vld [vmem:[#allocation6 + $0xf8] sm:$0xff]
    %s76 = sld [smem:[#allocation2]]
    %v77 = vstv %s76
    %78 = vmatprep.subr.mxu0 0.0
    %v79 = vand.u32 %v59, 4294901760
    %80 = vmatpush1.msra.mxu0 %v79
    %81 = vmatprep.subr.mxu0 0.0
    %v82 = vand.u32 %v58, 4294901760
    %83 = vmatpush1.msra.mxu0 %v82
    %84 = vmatprep.subr.mxu0 0.0
    %v85 = vand.u32 %v57, 4294901760
    %86 = vmatpush1.msra.mxu0 %v85
    %87 = vmatprep.subr.mxu0 0.0
    %v88 = vand.u32 %v56, 4294901760
    %89 = vmatpush1.msra.mxu0 %v88
    %90 = vmatprep.subr.mxu0 0.0
    %v91 = vand.u32 %v55, 4294901760
    %92 = vmatpush1.msra.mxu0 %v91
    %93 = vmatprep.subr.mxu0 0.0
    %v94 = vand.u32 %v54, 4294901760
    %95 = vmatpush1.msra.mxu0 %v94
    %96 = vmatprep.subr.mxu0 0.0
    %v97 = vand.u32 %v53, 4294901760
    %98 = vmatpush1.msra.mxu0 %v97
    %99 = vmatprep.subr.mxu0 0.0
    %v100 = vand.u32 %v52, 4294901760
    %101 = vmatpush1.msra.mxu0 %v100
    %102 = vmatprep.subr.mxu0 0.0
    %v103 = vand.u32 %v51, 4294901760
    %104 = vmatpush1.msra.mxu0 %v103
    %105 = vmatprep.subr.mxu0 0.0
    %v106 = vand.u32 %v50, 4294901760
    %107 = vmatpush1.msra.mxu0 %v106
    %108 = vmatprep.subr.mxu0 0.0
    %v109 = vand.u32 %v49, 4294901760
    %110 = vmatpush1.msra.mxu0 %v109
    %111 = vmatprep.subr.mxu0 0.0
    %v112 = vand.u32 %v48, 4294901760
    %113 = vmatpush1.msra.mxu0 %v112
    %114 = vmatprep.subr.mxu0 0.0
    %v115 = vand.u32 %v47, 4294901760
    %116 = vmatpush1.msra.mxu0 %v115
    %117 = vmatprep.subr.mxu0 0.0
    %v118 = vand.u32 %v46, 4294901760
    %119 = vmatpush1.msra.mxu0 %v118
    %120 = vmatprep.subr.mxu0 0.0
    %v121 = vand.u32 %v45, 4294901760
    %122 = vmatpush1.msra.mxu0 %v121
    %123 = vmatprep.subr.mxu0 0.0
    %v124 = vand.u32 %v44, 4294901760
    %125 = vmatpush1.msra.mxu0 %v124
    %126 = vmatprep.subr.mxu0 0.0
    %v127 = vand.u32 %v75, 4294901760
    %128 = vmatpush2.msra.mxu0 %v127
    %129 = vmatprep.subr.mxu0 0.0
    %v130 = vand.u32 %v74, 4294901760
    %131 = vmatpush2.msra.mxu0 %v130
    %132 = vmatprep.subr.mxu0 0.0
    %v133 = vand.u32 %v73, 4294901760
    %134 = vmatpush2.msra.mxu0 %v133
    %135 = vmatprep.subr.mxu0 0.0
    %v136 = vand.u32 %v72, 4294901760
    %137 = vmatpush2.msra.mxu0 %v136
    %138 = vmatprep.subr.mxu0 0.0
    %v139 = vand.u32 %v71, 4294901760
    %140 = vmatpush2.msra.mxu0 %v139
    %141 = vmatprep.subr.mxu0 0.0
    %v142 = vand.u32 %v70, 4294901760
    %143 = vmatpush2.msra.mxu0 %v142
    %144 = vmatprep.subr.mxu0 0.0
    %v145 = vand.u32 %v69, 4294901760
    %146 = vmatpush2.msra.mxu0 %v145
    %147 = vmatprep.subr.mxu0 0.0
    %v148 = vand.u32 %v68, 4294901760
    %149 = vmatpush2.msra.mxu0 %v148
    %150 = vmatprep.subr.mxu0 0.0
    %v151 = vand.u32 %v67, 4294901760
    %152 = vmatpush2.msra.mxu0 %v151
    %153 = vmatprep.subr.mxu0 0.0
    %v154 = vand.u32 %v66, 4294901760
    %155 = vmatpush2.msra.mxu0 %v154
    %156 = vmatprep.subr.mxu0 0.0
    %v157 = vand.u32 %v65, 4294901760
    %158 = vmatpush2.msra.mxu0 %v157
    %159 = vmatprep.subr.mxu0 0.0
    %v160 = vand.u32 %v64, 4294901760
    %161 = vmatpush2.msra.mxu0 %v160
    %162 = vmatprep.subr.mxu0 0.0
    %v163 = vand.u32 %v63, 4294901760
    %164 = vmatpush2.msra.mxu0 %v163
    %165 = vmatprep.subr.mxu0 0.0
    %v166 = vand.u32 %v62, 4294901760
    %167 = vmatpush2.msra.mxu0 %v166
    %168 = vmatprep.subr.mxu0 0.0
    %v169 = vand.u32 %v61, 4294901760
    %170 = vmatpush2.msra.mxu0 %v169
    %171 = vmatprep.subr.mxu0 0.0
    %v172 = vand.u32 %v60, 4294901760
    %173 = vmatpush2.msra.mxu0 %v172
    %v174 = vand.u32 %v43, 4294901760
    %v175 = vsub.f32 %v43, %v174
    %v176 = vand.u32 %v175, 4294901760
    %v177 = vsub.f32 %v175, %v176
    %v178 = vand.u32 %v177, 4294901760
    %179 = vmatprep.mubr.f32.mxu0 %v178
    %v180 = vand.u32 %v42, 4294901760
    %v181 = vsub.f32 %v42, %v180
    %v182 = vand.u32 %v181, 4294901760
    %v183 = vsub.f32 %v181, %v182
    %v184 = vand.u32 %v183, 4294901760
    %185 = vmatmul.mubr.f32.gmra.mxu0 %v184
    %v186 = vpop.f32.mrf.mxu0
    %v187 = vadd.f32 %v77, %v186
    %v188 = vpop.f32.mrf.mxu0
    %189 = vdwg.mxu0
    %190 = vmatprep.subr.mxu0 0.0
    %v191 = vand.u32 %v59, 4294901760
    %v192 = vsub.f32 %v59, %v191
    %v193 = vand.u32 %v192, 4294901760
    %v194 = vsub.f32 %v192, %v193
    %v195 = vand.u32 %v194, 4294901760
    %196 = vmatpush1.msra.mxu0 %v195
    %197 = vmatprep.subr.mxu0 0.0
    %v198 = vand.u32 %v58, 4294901760
    %v199 = vsub.f32 %v58, %v198
    %v200 = vand.u32 %v199, 4294901760
    %v201 = vsub.f32 %v199, %v200
    %v202 = vand.u32 %v201, 4294901760
    %203 = vmatpush1.msra.mxu0 %v202
    %204 = vmatprep.subr.mxu0 0.0
    %v205 = vand.u32 %v57, 4294901760
    %v206 = vsub.f32 %v57, %v205
    %v207 = vand.u32 %v206, 4294901760
    %v208 = vsub.f32 %v206, %v207
    %v209 = vand.u32 %v208, 4294901760
    %210 = vmatpush1.msra.mxu0 %v209
    %211 = vmatprep.subr.mxu0 0.0
    %v212 = vand.u32 %v56, 4294901760
    %v213 = vsub.f32 %v56, %v212
    %v214 = vand.u32 %v213, 4294901760
    %v215 = vsub.f32 %v213, %v214
    %v216 = vand.u32 %v215, 4294901760
    %217 = vmatpush1.msra.mxu0 %v216
    %218 = vmatprep.subr.mxu0 0.0
    %v219 = vand.u32 %v55, 4294901760
    %v220 = vsub.f32 %v55, %v219
    %v221 = vand.u32 %v220, 4294901760
    %v222 = vsub.f32 %v220, %v221
    %v223 = vand.u32 %v222, 4294901760
    %224 = vmatpush1.msra.mxu0 %v223
    %225 = vmatprep.subr.mxu0 0.0
    %v226 = vand.u32 %v54, 4294901760
    %v227 = vsub.f32 %v54, %v226
    %v228 = vand.u32 %v227, 4294901760
    %v229 = vsub.f32 %v227, %v228
    %v230 = vand.u32 %v229, 4294901760
    %231 = vmatpush1.msra.mxu0 %v230
    %232 = vmatprep.subr.mxu0 0.0
    %v233 = vand.u32 %v53, 4294901760
    %v234 = vsub.f32 %v53, %v233
    %v235 = vand.u32 %v234, 4294901760
    %v236 = vsub.f32 %v234, %v235
    %v237 = vand.u32 %v236, 4294901760
    %238 = vmatpush1.msra.mxu0 %v237
    %239 = vmatprep.subr.mxu0 0.0
    %v240 = vand.u32 %v52, 4294901760
    %v241 = vsub.f32 %v52, %v240
    %v242 = vand.u32 %v241, 4294901760
    %v243 = vsub.f32 %v241, %v242
    %v244 = vand.u32 %v243, 4294901760
    %245 = vmatpush1.msra.mxu0 %v244
    %246 = vmatprep.subr.mxu0 0.0
    %v247 = vand.u32 %v51, 4294901760
    %v248 = vsub.f32 %v51, %v247
    %v249 = vand.u32 %v248, 4294901760
    %v250 = vsub.f32 %v248, %v249
    %v251 = vand.u32 %v250, 4294901760
    %252 = vmatpush1.msra.mxu0 %v251
    %253 = vmatprep.subr.mxu0 0.0
    %v254 = vand.u32 %v50, 4294901760
    %v255 = vsub.f32 %v50, %v254
    %v256 = vand.u32 %v255, 4294901760
    %v257 = vsub.f32 %v255, %v256
    %v258 = vand.u32 %v257, 4294901760
    %259 = vmatpush1.msra.mxu0 %v258
    %260 = vmatprep.subr.mxu0 0.0
    %v261 = vand.u32 %v49, 4294901760
    %v262 = vsub.f32 %v49, %v261
    %v263 = vand.u32 %v262, 4294901760
    %v264 = vsub.f32 %v262, %v263
    %v265 = vand.u32 %v264, 4294901760
    %266 = vmatpush1.msra.mxu0 %v265
    %267 = vmatprep.subr.mxu0 0.0
    %v268 = vand.u32 %v48, 4294901760
    %v269 = vsub.f32 %v48, %v268
    %v270 = vand.u32 %v269, 4294901760
    %v271 = vsub.f32 %v269, %v270
    %v272 = vand.u32 %v271, 4294901760
    %273 = vmatpush1.msra.mxu0 %v272
    %274 = vmatprep.subr.mxu0 0.0
    %v275 = vand.u32 %v47, 4294901760
    %v276 = vsub.f32 %v47, %v275
    %v277 = vand.u32 %v276, 4294901760
    %v278 = vsub.f32 %v276, %v277
    %v279 = vand.u32 %v278, 4294901760
    %280 = vmatpush1.msra.mxu0 %v279
    %281 = vmatprep.subr.mxu0 0.0
    %v282 = vand.u32 %v46, 4294901760
    %v283 = vsub.f32 %v46, %v282
    %v284 = vand.u32 %v283, 4294901760
    %v285 = vsub.f32 %v283, %v284
    %v286 = vand.u32 %v285, 4294901760
    %287 = vmatpush1.msra.mxu0 %v286
    %288 = vmatprep.subr.mxu0 0.0
    %v289 = vand.u32 %v45, 4294901760
    %v290 = vsub.f32 %v45, %v289
    %v291 = vand.u32 %v290, 4294901760
    %v292 = vsub.f32 %v290, %v291
    %v293 = vand.u32 %v292, 4294901760
    %294 = vmatpush1.msra.mxu0 %v293
    %295 = vmatprep.subr.mxu0 0.0
    %v296 = vand.u32 %v44, 4294901760
    %v297 = vsub.f32 %v44, %v296
    %v298 = vand.u32 %v297, 4294901760
    %v299 = vsub.f32 %v297, %v298
    %v300 = vand.u32 %v299, 4294901760
    %301 = vmatpush1.msra.mxu0 %v300
    %302 = vmatprep.subr.mxu0 0.0
    %v303 = vand.u32 %v75, 4294901760
    %v304 = vsub.f32 %v75, %v303
    %v305 = vand.u32 %v304, 4294901760
    %v306 = vsub.f32 %v304, %v305
    %v307 = vand.u32 %v306, 4294901760
    %308 = vmatpush2.msra.mxu0 %v307
    %309 = vmatprep.subr.mxu0 0.0
    %v310 = vand.u32 %v74, 4294901760
    %v311 = vsub.f32 %v74, %v310
    %v312 = vand.u32 %v311, 4294901760
    %v313 = vsub.f32 %v311, %v312
    %v314 = vand.u32 %v313, 4294901760
    %315 = vmatpush2.msra.mxu0 %v314
    %316 = vmatprep.subr.mxu0 0.0
    %v317 = vand.u32 %v73, 4294901760
    %v318 = vsub.f32 %v73, %v317
    %v319 = vand.u32 %v318, 4294901760
    %v320 = vsub.f32 %v318, %v319
    %v321 = vand.u32 %v320, 4294901760
    %322 = vmatpush2.msra.mxu0 %v321
    %323 = vmatprep.subr.mxu0 0.0
    %v324 = vand.u32 %v72, 4294901760
    %v325 = vsub.f32 %v72, %v324
    %v326 = vand.u32 %v325, 4294901760
    %v327 = vsub.f32 %v325, %v326
    %v328 = vand.u32 %v327, 4294901760
    %329 = vmatpush2.msra.mxu0 %v328
    %330 = vmatprep.subr.mxu0 0.0
    %v331 = vand.u32 %v71, 4294901760
    %v332 = vsub.f32 %v71, %v331
    %v333 = vand.u32 %v332, 4294901760
    %v334 = vsub.f32 %v332, %v333
    %v335 = vand.u32 %v334, 4294901760
    %336 = vmatpush2.msra.mxu0 %v335
    %337 = vmatprep.subr.mxu0 0.0
    %v338 = vand.u32 %v70, 4294901760
    %v339 = vsub.f32 %v70, %v338
    %v340 = vand.u32 %v339, 4294901760
    %v341 = vsub.f32 %v339, %v340
    %v342 = vand.u32 %v341, 4294901760
    %343 = vmatpush2.msra.mxu0 %v342
    %344 = vmatprep.subr.mxu0 0.0
    %v345 = vand.u32 %v69, 4294901760
    %v346 = vsub.f32 %v69, %v345
    %v347 = vand.u32 %v346, 4294901760
    %v348 = vsub.f32 %v346, %v347
    %v349 = vand.u32 %v348, 4294901760
    %350 = vmatpush2.msra.mxu0 %v349
    %351 = vmatprep.subr.mxu0 0.0
    %v352 = vand.u32 %v68, 4294901760
    %v353 = vsub.f32 %v68, %v352
    %v354 = vand.u32 %v353, 4294901760
    %v355 = vsub.f32 %v353, %v354
    %v356 = vand.u32 %v355, 4294901760
    %357 = vmatpush2.msra.mxu0 %v356
    %358 = vmatprep.subr.mxu0 0.0
    %v359 = vand.u32 %v67, 4294901760
    %v360 = vsub.f32 %v67, %v359
    %v361 = vand.u32 %v360, 4294901760
    %v362 = vsub.f32 %v360, %v361
    %v363 = vand.u32 %v362, 4294901760
    %364 = vmatpush2.msra.mxu0 %v363
    %365 = vmatprep.subr.mxu0 0.0
    %v366 = vand.u32 %v66, 4294901760
    %v367 = vsub.f32 %v66, %v366
    %v368 = vand.u32 %v367, 4294901760
    %v369 = vsub.f32 %v367, %v368
    %v370 = vand.u32 %v369, 4294901760
    %371 = vmatpush2.msra.mxu0 %v370
    %372 = vmatprep.subr.mxu0 0.0
    %v373 = vand.u32 %v65, 4294901760
    %v374 = vsub.f32 %v65, %v373
    %v375 = vand.u32 %v374, 4294901760
    %v376 = vsub.f32 %v374, %v375
    %v377 = vand.u32 %v376, 4294901760
    %378 = vmatpush2.msra.mxu0 %v377
    %379 = vmatprep.subr.mxu0 0.0
    %v380 = vand.u32 %v64, 4294901760
    %v381 = vsub.f32 %v64, %v380
    %v382 = vand.u32 %v381, 4294901760
    %v383 = vsub.f32 %v381, %v382
    %v384 = vand.u32 %v383, 4294901760
    %385 = vmatpush2.msra.mxu0 %v384
    %386 = vmatprep.subr.mxu0 0.0
    %v387 = vand.u32 %v63, 4294901760
    %v388 = vsub.f32 %v63, %v387
    %v389 = vand.u32 %v388, 4294901760
    %v390 = vsub.f32 %v388, %v389
    %v391 = vand.u32 %v390, 4294901760
    %392 = vmatpush2.msra.mxu0 %v391
    %393 = vmatprep.subr.mxu0 0.0
    %v394 = vand.u32 %v62, 4294901760
    %v395 = vsub.f32 %v62, %v394
    %v396 = vand.u32 %v395, 4294901760
    %v397 = vsub.f32 %v395, %v396
    %v398 = vand.u32 %v397, 4294901760
    %399 = vmatpush2.msra.mxu0 %v398
    %400 = vmatprep.subr.mxu0 0.0
    %v401 = vand.u32 %v61, 4294901760
    %v402 = vsub.f32 %v61, %v401
    %v403 = vand.u32 %v402, 4294901760
    %v404 = vsub.f32 %v402, %v403
    %v405 = vand.u32 %v404, 4294901760
    %406 = vmatpush2.msra.mxu0 %v405
    %407 = vmatprep.subr.mxu0 0.0
    %v408 = vand.u32 %v60, 4294901760
    %v409 = vsub.f32 %v60, %v408
    %v410 = vand.u32 %v409, 4294901760
    %v411 = vsub.f32 %v409, %v410
    %v412 = vand.u32 %v411, 4294901760
    %413 = vmatpush2.msra.mxu0 %v412
    %v414 = vand.u32 %v43, 4294901760
    %415 = vmatprep.mubr.f32.mxu0 %v414
    %v416 = vand.u32 %v42, 4294901760
    %417 = vmatmul.mubr.f32.gmra.mxu0 %v416
    %v418 = vpop.f32.mrf.mxu0
    %v419 = vadd.f32 %v187, %v418
    %v420 = vpop.f32.mrf.mxu0
    %421 = vdwg.mxu0
    %422 = vmatprep.subr.mxu0 0.0
    %v423 = vand.u32 %v59, 4294901760
    %v424 = vsub.f32 %v59, %v423
    %425 = vmatpush1.msra.mxu0 %v424
    %426 = vmatprep.subr.mxu0 0.0
    %v427 = vand.u32 %v58, 4294901760
    %v428 = vsub.f32 %v58, %v427
    %429 = vmatpush1.msra.mxu0 %v428
    %430 = vmatprep.subr.mxu0 0.0
    %v431 = vand.u32 %v57, 4294901760
    %v432 = vsub.f32 %v57, %v431
    %433 = vmatpush1.msra.mxu0 %v432
    %434 = vmatprep.subr.mxu0 0.0
    %v435 = vand.u32 %v56, 4294901760
    %v436 = vsub.f32 %v56, %v435
    %437 = vmatpush1.msra.mxu0 %v436
    %438 = vmatprep.subr.mxu0 0.0
    %v439 = vand.u32 %v55, 4294901760
    %v440 = vsub.f32 %v55, %v439
    %441 = vmatpush1.msra.mxu0 %v440
    %442 = vmatprep.subr.mxu0 0.0
    %v443 = vand.u32 %v54, 4294901760
    %v444 = vsub.f32 %v54, %v443
    %445 = vmatpush1.msra.mxu0 %v444
    %446 = vmatprep.subr.mxu0 0.0
    %v447 = vand.u32 %v53, 4294901760
    %v448 = vsub.f32 %v53, %v447
    %449 = vmatpush1.msra.mxu0 %v448
    %450 = vmatprep.subr.mxu0 0.0
    %v451 = vand.u32 %v52, 4294901760
    %v452 = vsub.f32 %v52, %v451
    %453 = vmatpush1.msra.mxu0 %v452
    %454 = vmatprep.subr.mxu0 0.0
    %v455 = vand.u32 %v51, 4294901760
    %v456 = vsub.f32 %v51, %v455
    %457 = vmatpush1.msra.mxu0 %v456
    %458 = vmatprep.subr.mxu0 0.0
    %v459 = vand.u32 %v50, 4294901760
    %v460 = vsub.f32 %v50, %v459
    %461 = vmatpush1.msra.mxu0 %v460
    %462 = vmatprep.subr.mxu0 0.0
    %v463 = vand.u32 %v49, 4294901760
    %v464 = vsub.f32 %v49, %v463
    %465 = vmatpush1.msra.mxu0 %v464
    %466 = vmatprep.subr.mxu0 0.0
    %v467 = vand.u32 %v48, 4294901760
    %v468 = vsub.f32 %v48, %v467
    %469 = vmatpush1.msra.mxu0 %v468
    %470 = vmatprep.subr.mxu0 0.0
    %v471 = vand.u32 %v47, 4294901760
    %v472 = vsub.f32 %v47, %v471
    %473 = vmatpush1.msra.mxu0 %v472
    %474 = vmatprep.subr.mxu0 0.0
    %v475 = vand.u32 %v46, 4294901760
    %v476 = vsub.f32 %v46, %v475
    %477 = vmatpush1.msra.mxu0 %v476
    %478 = vmatprep.subr.mxu0 0.0
    %v479 = vand.u32 %v45, 4294901760
    %v480 = vsub.f32 %v45, %v479
    %481 = vmatpush1.msra.mxu0 %v480
    %482 = vmatprep.subr.mxu0 0.0
    %v483 = vand.u32 %v44, 4294901760
    %v484 = vsub.f32 %v44, %v483
    %485 = vmatpush1.msra.mxu0 %v484
    %486 = vmatprep.subr.mxu0 0.0
    %v487 = vand.u32 %v75, 4294901760
    %v488 = vsub.f32 %v75, %v487
    %489 = vmatpush2.msra.mxu0 %v488
    %490 = vmatprep.subr.mxu0 0.0
    %v491 = vand.u32 %v74, 4294901760
    %v492 = vsub.f32 %v74, %v491
    %493 = vmatpush2.msra.mxu0 %v492
    %494 = vmatprep.subr.mxu0 0.0
    %v495 = vand.u32 %v73, 4294901760
    %v496 = vsub.f32 %v73, %v495
    %497 = vmatpush2.msra.mxu0 %v496
    %498 = vmatprep.subr.mxu0 0.0
    %v499 = vand.u32 %v72, 4294901760
    %v500 = vsub.f32 %v72, %v499
    %501 = vmatpush2.msra.mxu0 %v500
    %502 = vmatprep.subr.mxu0 0.0
    %v503 = vand.u32 %v71, 4294901760
    %v504 = vsub.f32 %v71, %v503
    %505 = vmatpush2.msra.mxu0 %v504
    %506 = vmatprep.subr.mxu0 0.0
    %v507 = vand.u32 %v70, 4294901760
    %v508 = vsub.f32 %v70, %v507
    %509 = vmatpush2.msra.mxu0 %v508
    %510 = vmatprep.subr.mxu0 0.0
    %v511 = vand.u32 %v69, 4294901760
    %v512 = vsub.f32 %v69, %v511
    %513 = vmatpush2.msra.mxu0 %v512
    %514 = vmatprep.subr.mxu0 0.0
    %v515 = vand.u32 %v68, 4294901760
    %v516 = vsub.f32 %v68, %v515
    %517 = vmatpush2.msra.mxu0 %v516
    %518 = vmatprep.subr.mxu0 0.0
    %v519 = vand.u32 %v67, 4294901760
    %v520 = vsub.f32 %v67, %v519
    %521 = vmatpush2.msra.mxu0 %v520
    %522 = vmatprep.subr.mxu0 0.0
    %v523 = vand.u32 %v66, 4294901760
    %v524 = vsub.f32 %v66, %v523
    %525 = vmatpush2.msra.mxu0 %v524
    %526 = vmatprep.subr.mxu0 0.0
    %v527 = vand.u32 %v65, 4294901760
    %v528 = vsub.f32 %v65, %v527
    %529 = vmatpush2.msra.mxu0 %v528
    %530 = vmatprep.subr.mxu0 0.0
    %v531 = vand.u32 %v64, 4294901760
    %v532 = vsub.f32 %v64, %v531
    %533 = vmatpush2.msra.mxu0 %v532
    %534 = vmatprep.subr.mxu0 0.0
    %v535 = vand.u32 %v63, 4294901760
    %v536 = vsub.f32 %v63, %v535
    %537 = vmatpush2.msra.mxu0 %v536
    %538 = vmatprep.subr.mxu0 0.0
    %v539 = vand.u32 %v62, 4294901760
    %v540 = vsub.f32 %v62, %v539
    %541 = vmatpush2.msra.mxu0 %v540
    %542 = vmatprep.subr.mxu0 0.0
    %v543 = vand.u32 %v61, 4294901760
    %v544 = vsub.f32 %v61, %v543
    %545 = vmatpush2.msra.mxu0 %v544
    %546 = vmatprep.subr.mxu0 0.0
    %v547 = vand.u32 %v60, 4294901760
    %v548 = vsub.f32 %v60, %v547
    %549 = vmatpush2.msra.mxu0 %v548
    %v550 = vand.u32 %v43, 4294901760
    %v551 = vsub.f32 %v43, %v550
    %552 = vmatprep.mubr.f32.mxu0 %v551
    %v553 = vand.u32 %v42, 4294901760
    %v554 = vsub.f32 %v42, %v553
    %555 = vmatmul.mubr.f32.gmra.mxu0 %v554
    %v556 = vpop.f32.mrf.mxu0
    %v557 = vadd.f32 %v419, %v556
    %v558 = vpop.f32.mrf.mxu0
    %559 = vdwg.mxu0
    %560 = vmatprep.subr.mxu0 0.0
    %v561 = vand.u32 %v59, 4294901760
    %562 = vmatpush1.msra.mxu0 %v561
    %563 = vmatprep.subr.mxu0 0.0
    %v564 = vand.u32 %v58, 4294901760
    %565 = vmatpush1.msra.mxu0 %v564
    %566 = vmatprep.subr.mxu0 0.0
    %v567 = vand.u32 %v57, 4294901760
    %568 = vmatpush1.msra.mxu0 %v567
    %569 = vmatprep.subr.mxu0 0.0
    %v570 = vand.u32 %v56, 4294901760
    %571 = vmatpush1.msra.mxu0 %v570
    %572 = vmatprep.subr.mxu0 0.0
    %v573 = vand.u32 %v55, 4294901760
    %574 = vmatpush1.msra.mxu0 %v573
    %575 = vmatprep.subr.mxu0 0.0
    %v576 = vand.u32 %v54, 4294901760
    %577 = vmatpush1.msra.mxu0 %v576
    %578 = vmatprep.subr.mxu0 0.0
    %v579 = vand.u32 %v53, 4294901760
    %580 = vmatpush1.msra.mxu0 %v579
    %581 = vmatprep.subr.mxu0 0.0
    %v582 = vand.u32 %v52, 4294901760
    %583 = vmatpush1.msra.mxu0 %v582
    %584 = vmatprep.subr.mxu0 0.0
    %v585 = vand.u32 %v51, 4294901760
    %586 = vmatpush1.msra.mxu0 %v585
    %587 = vmatprep.subr.mxu0 0.0
    %v588 = vand.u32 %v50, 4294901760
    %589 = vmatpush1.msra.mxu0 %v588
    %590 = vmatprep.subr.mxu0 0.0
    %v591 = vand.u32 %v49, 4294901760
    %592 = vmatpush1.msra.mxu0 %v591
    %593 = vmatprep.subr.mxu0 0.0
    %v594 = vand.u32 %v48, 4294901760
    %595 = vmatpush1.msra.mxu0 %v594
    %596 = vmatprep.subr.mxu0 0.0
    %v597 = vand.u32 %v47, 4294901760
    %598 = vmatpush1.msra.mxu0 %v597
    %599 = vmatprep.subr.mxu0 0.0
    %v600 = vand.u32 %v46, 4294901760
    %601 = vmatpush1.msra.mxu0 %v600
    %602 = vmatprep.subr.mxu0 0.0
    %v603 = vand.u32 %v45, 4294901760
    %604 = vmatpush1.msra.mxu0 %v603
    %605 = vmatprep.subr.mxu0 0.0
    %v606 = vand.u32 %v44, 4294901760
    %607 = vmatpush1.msra.mxu0 %v606
    %608 = vmatprep.subr.mxu0 0.0
    %v609 = vand.u32 %v75, 4294901760
    %610 = vmatpush2.msra.mxu0 %v609
    %611 = vmatprep.subr.mxu0 0.0
    %v612 = vand.u32 %v74, 4294901760
    %613 = vmatpush2.msra.mxu0 %v612
    %614 = vmatprep.subr.mxu0 0.0
    %v615 = vand.u32 %v73, 4294901760
    %616 = vmatpush2.msra.mxu0 %v615
    %617 = vmatprep.subr.mxu0 0.0
    %v618 = vand.u32 %v72, 4294901760
    %619 = vmatpush2.msra.mxu0 %v618
    %620 = vmatprep.subr.mxu0 0.0
    %v621 = vand.u32 %v71, 4294901760
    %622 = vmatpush2.msra.mxu0 %v621
    %623 = vmatprep.subr.mxu0 0.0
    %v624 = vand.u32 %v70, 4294901760
    %625 = vmatpush2.msra.mxu0 %v624
    %626 = vmatprep.subr.mxu0 0.0
    %v627 = vand.u32 %v69, 4294901760
    %628 = vmatpush2.msra.mxu0 %v627
    %629 = vmatprep.subr.mxu0 0.0
    %v630 = vand.u32 %v68, 4294901760
    %631 = vmatpush2.msra.mxu0 %v630
    %632 = vmatprep.subr.mxu0 0.0
    %v633 = vand.u32 %v67, 4294901760
    %634 = vmatpush2.msra.mxu0 %v633
    %635 = vmatprep.subr.mxu0 0.0
    %v636 = vand.u32 %v66, 4294901760
    %637 = vmatpush2.msra.mxu0 %v636
    %638 = vmatprep.subr.mxu0 0.0
    %v639 = vand.u32 %v65, 4294901760
    %640 = vmatpush2.msra.mxu0 %v639
    %641 = vmatprep.subr.mxu0 0.0
    %v642 = vand.u32 %v64, 4294901760
    %643 = vmatpush2.msra.mxu0 %v642
    %644 = vmatprep.subr.mxu0 0.0
    %v645 = vand.u32 %v63, 4294901760
    %646 = vmatpush2.msra.mxu0 %v645
    %647 = vmatprep.subr.mxu0 0.0
    %v648 = vand.u32 %v62, 4294901760
    %649 = vmatpush2.msra.mxu0 %v648
    %650 = vmatprep.subr.mxu0 0.0
    %v651 = vand.u32 %v61, 4294901760
    %652 = vmatpush2.msra.mxu0 %v651
    %653 = vmatprep.subr.mxu0 0.0
    %v654 = vand.u32 %v60, 4294901760
    %655 = vmatpush2.msra.mxu0 %v654
    %v656 = vand.u32 %v43, 4294901760
    %v657 = vsub.f32 %v43, %v656
    %v658 = vand.u32 %v657, 4294901760
    %659 = vmatprep.mubr.f32.mxu0 %v658
    %v660 = vand.u32 %v42, 4294901760
    %v661 = vsub.f32 %v42, %v660
    %v662 = vand.u32 %v661, 4294901760
    %663 = vmatmul.mubr.f32.gmra.mxu0 %v662
    %v664 = vpop.f32.mrf.mxu0
    %v665 = vadd.f32 %v557, %v664
    %v666 = vpop.f32.mrf.mxu0
    %667 = vdwg.mxu0
    %668 = vmatprep.subr.mxu0 0.0
    %v669 = vand.u32 %v59, 4294901760
    %v670 = vsub.f32 %v59, %v669
    %v671 = vand.u32 %v670, 4294901760
    %672 = vmatpush1.msra.mxu0 %v671
    %673 = vmatprep.subr.mxu0 0.0
    %v674 = vand.u32 %v58, 4294901760
    %v675 = vsub.f32 %v58, %v674
    %v676 = vand.u32 %v675, 4294901760
    %677 = vmatpush1.msra.mxu0 %v676
    %678 = vmatprep.subr.mxu0 0.0
    %v679 = vand.u32 %v57, 4294901760
    %v680 = vsub.f32 %v57, %v679
    %v681 = vand.u32 %v680, 4294901760
    %682 = vmatpush1.msra.mxu0 %v681
    %683 = vmatprep.subr.mxu0 0.0
    %v684 = vand.u32 %v56, 4294901760
    %v685 = vsub.f32 %v56, %v684
    %v686 = vand.u32 %v685, 4294901760
    %687 = vmatpush1.msra.mxu0 %v686
    %688 = vmatprep.subr.mxu0 0.0
    %v689 = vand.u32 %v55, 4294901760
    %v690 = vsub.f32 %v55, %v689
    %v691 = vand.u32 %v690, 4294901760
    %692 = vmatpush1.msra.mxu0 %v691
    %693 = vmatprep.subr.mxu0 0.0
    %v694 = vand.u32 %v54, 4294901760
    %v695 = vsub.f32 %v54, %v694
    %v696 = vand.u32 %v695, 4294901760
    %697 = vmatpush1.msra.mxu0 %v696
    %698 = vmatprep.subr.mxu0 0.0
    %v699 = vand.u32 %v53, 4294901760
    %v700 = vsub.f32 %v53, %v699
    %v701 = vand.u32 %v700, 4294901760
    %702 = vmatpush1.msra.mxu0 %v701
    %703 = vmatprep.subr.mxu0 0.0
    %v704 = vand.u32 %v52, 4294901760
    %v705 = vsub.f32 %v52, %v704
    %v706 = vand.u32 %v705, 4294901760
    %707 = vmatpush1.msra.mxu0 %v706
    %708 = vmatprep.subr.mxu0 0.0
    %v709 = vand.u32 %v51, 4294901760
    %v710 = vsub.f32 %v51, %v709
    %v711 = vand.u32 %v710, 4294901760
    %712 = vmatpush1.msra.mxu0 %v711
    %713 = vmatprep.subr.mxu0 0.0
    %v714 = vand.u32 %v50, 4294901760
    %v715 = vsub.f32 %v50, %v714
    %v716 = vand.u32 %v715, 4294901760
    %717 = vmatpush1.msra.mxu0 %v716
    %718 = vmatprep.subr.mxu0 0.0
    %v719 = vand.u32 %v49, 4294901760
    %v720 = vsub.f32 %v49, %v719
    %v721 = vand.u32 %v720, 4294901760
    %722 = vmatpush1.msra.mxu0 %v721
    %723 = vmatprep.subr.mxu0 0.0
    %v724 = vand.u32 %v48, 4294901760
    %v725 = vsub.f32 %v48, %v724
    %v726 = vand.u32 %v725, 4294901760
    %727 = vmatpush1.msra.mxu0 %v726
    %728 = vmatprep.subr.mxu0 0.0
    %v729 = vand.u32 %v47, 4294901760
    %v730 = vsub.f32 %v47, %v729
    %v731 = vand.u32 %v730, 4294901760
    %732 = vmatpush1.msra.mxu0 %v731
    %733 = vmatprep.subr.mxu0 0.0
    %v734 = vand.u32 %v46, 4294901760
    %v735 = vsub.f32 %v46, %v734
    %v736 = vand.u32 %v735, 4294901760
    %737 = vmatpush1.msra.mxu0 %v736
    %738 = vmatprep.subr.mxu0 0.0
    %v739 = vand.u32 %v45, 4294901760
    %v740 = vsub.f32 %v45, %v739
    %v741 = vand.u32 %v740, 4294901760
    %742 = vmatpush1.msra.mxu0 %v741
    %743 = vmatprep.subr.mxu0 0.0
    %v744 = vand.u32 %v44, 4294901760
    %v745 = vsub.f32 %v44, %v744
    %v746 = vand.u32 %v745, 4294901760
    %747 = vmatpush1.msra.mxu0 %v746
    %748 = vmatprep.subr.mxu0 0.0
    %v749 = vand.u32 %v75, 4294901760
    %v750 = vsub.f32 %v75, %v749
    %v751 = vand.u32 %v750, 4294901760
    %752 = vmatpush2.msra.mxu0 %v751
    %753 = vmatprep.subr.mxu0 0.0
    %v754 = vand.u32 %v74, 4294901760
    %v755 = vsub.f32 %v74, %v754
    %v756 = vand.u32 %v755, 4294901760
    %757 = vmatpush2.msra.mxu0 %v756
    %758 = vmatprep.subr.mxu0 0.0
    %v759 = vand.u32 %v73, 4294901760
    %v760 = vsub.f32 %v73, %v759
    %v761 = vand.u32 %v760, 4294901760
    %762 = vmatpush2.msra.mxu0 %v761
    %763 = vmatprep.subr.mxu0 0.0
    %v764 = vand.u32 %v72, 4294901760
    %v765 = vsub.f32 %v72, %v764
    %v766 = vand.u32 %v765, 4294901760
    %767 = vmatpush2.msra.mxu0 %v766
    %768 = vmatprep.subr.mxu0 0.0
    %v769 = vand.u32 %v71, 4294901760
    %v770 = vsub.f32 %v71, %v769
    %v771 = vand.u32 %v770, 4294901760
    %772 = vmatpush2.msra.mxu0 %v771
    %773 = vmatprep.subr.mxu0 0.0
    %v774 = vand.u32 %v70, 4294901760
    %v775 = vsub.f32 %v70, %v774
    %v776 = vand.u32 %v775, 4294901760
    %777 = vmatpush2.msra.mxu0 %v776
    %778 = vmatprep.subr.mxu0 0.0
    %v779 = vand.u32 %v69, 4294901760
    %v780 = vsub.f32 %v69, %v779
    %v781 = vand.u32 %v780, 4294901760
    %782 = vmatpush2.msra.mxu0 %v781
    %783 = vmatprep.subr.mxu0 0.0
    %v784 = vand.u32 %v68, 4294901760
    %v785 = vsub.f32 %v68, %v784
    %v786 = vand.u32 %v785, 4294901760
    %787 = vmatpush2.msra.mxu0 %v786
    %788 = vmatprep.subr.mxu0 0.0
    %v789 = vand.u32 %v67, 4294901760
    %v790 = vsub.f32 %v67, %v789
    %v791 = vand.u32 %v790, 4294901760
    %792 = vmatpush2.msra.mxu0 %v791
    %793 = vmatprep.subr.mxu0 0.0
    %v794 = vand.u32 %v66, 4294901760
    %v795 = vsub.f32 %v66, %v794
    %v796 = vand.u32 %v795, 4294901760
    %797 = vmatpush2.msra.mxu0 %v796
    %798 = vmatprep.subr.mxu0 0.0
    %v799 = vand.u32 %v65, 4294901760
    %v800 = vsub.f32 %v65, %v799
    %v801 = vand.u32 %v800, 4294901760
    %802 = vmatpush2.msra.mxu0 %v801
    %803 = vmatprep.subr.mxu0 0.0
    %v804 = vand.u32 %v64, 4294901760
    %v805 = vsub.f32 %v64, %v804
    %v806 = vand.u32 %v805, 4294901760
    %807 = vmatpush2.msra.mxu0 %v806
    %808 = vmatprep.subr.mxu0 0.0
    %v809 = vand.u32 %v63, 4294901760
    %v810 = vsub.f32 %v63, %v809
    %v811 = vand.u32 %v810, 4294901760
    %812 = vmatpush2.msra.mxu0 %v811
    %813 = vmatprep.subr.mxu0 0.0
    %v814 = vand.u32 %v62, 4294901760
    %v815 = vsub.f32 %v62, %v814
    %v816 = vand.u32 %v815, 4294901760
    %817 = vmatpush2.msra.mxu0 %v816
    %818 = vmatprep.subr.mxu0 0.0
    %v819 = vand.u32 %v61, 4294901760
    %v820 = vsub.f32 %v61, %v819
    %v821 = vand.u32 %v820, 4294901760
    %822 = vmatpush2.msra.mxu0 %v821
    %823 = vmatprep.subr.mxu0 0.0
    %v824 = vand.u32 %v60, 4294901760
    %v825 = vsub.f32 %v60, %v824
    %v826 = vand.u32 %v825, 4294901760
    %827 = vmatpush2.msra.mxu0 %v826
    %v828 = vand.u32 %v43, 4294901760
    %829 = vmatprep.mubr.f32.mxu0 %v828
    %v830 = vand.u32 %v42, 4294901760
    %831 = vmatmul.mubr.f32.gmra.mxu0 %v830
    %v832 = vpop.f32.mrf.mxu0
    %v833 = vadd.f32 %v665, %v832
    %v834 = vpop.f32.mrf.mxu0
    %835 = vdwg.mxu0
    %836 = vmatprep.subr.mxu0 0.0
    %v837 = vand.u32 %v59, 4294901760
    %838 = vmatpush1.msra.mxu0 %v837
    %839 = vmatprep.subr.mxu0 0.0
    %v840 = vand.u32 %v58, 4294901760
    %841 = vmatpush1.msra.mxu0 %v840
    %842 = vmatprep.subr.mxu0 0.0
    %v843 = vand.u32 %v57, 4294901760
    %844 = vmatpush1.msra.mxu0 %v843
    %845 = vmatprep.subr.mxu0 0.0
    %v846 = vand.u32 %v56, 4294901760
    %847 = vmatpush1.msra.mxu0 %v846
    %848 = vmatprep.subr.mxu0 0.0
    %v849 = vand.u32 %v55, 4294901760
    %850 = vmatpush1.msra.mxu0 %v849
    %851 = vmatprep.subr.mxu0 0.0
    %v852 = vand.u32 %v54, 4294901760
    %853 = vmatpush1.msra.mxu0 %v852
    %854 = vmatprep.subr.mxu0 0.0
    %v855 = vand.u32 %v53, 4294901760
    %856 = vmatpush1.msra.mxu0 %v855
    %857 = vmatprep.subr.mxu0 0.0
    %v858 = vand.u32 %v52, 4294901760
    %859 = vmatpush1.msra.mxu0 %v858
    %860 = vmatprep.subr.mxu0 0.0
    %v861 = vand.u32 %v51, 4294901760
    %862 = vmatpush1.msra.mxu0 %v861
    %863 = vmatprep.subr.mxu0 0.0
    %v864 = vand.u32 %v50, 4294901760
    %865 = vmatpush1.msra.mxu0 %v864
    %866 = vmatprep.subr.mxu0 0.0
    %v867 = vand.u32 %v49, 4294901760
    %868 = vmatpush1.msra.mxu0 %v867
    %869 = vmatprep.subr.mxu0 0.0
    %v870 = vand.u32 %v48, 4294901760
    %871 = vmatpush1.msra.mxu0 %v870
    %872 = vmatprep.subr.mxu0 0.0
    %v873 = vand.u32 %v47, 4294901760
    %874 = vmatpush1.msra.mxu0 %v873
    %875 = vmatprep.subr.mxu0 0.0
    %v876 = vand.u32 %v46, 4294901760
    %877 = vmatpush1.msra.mxu0 %v876
    %878 = vmatprep.subr.mxu0 0.0
    %v879 = vand.u32 %v45, 4294901760
    %880 = vmatpush1.msra.mxu0 %v879
    %881 = vmatprep.subr.mxu0 0.0
    %v882 = vand.u32 %v44, 4294901760
    %883 = vmatpush1.msra.mxu0 %v882
    %884 = vmatprep.subr.mxu0 0.0
    %v885 = vand.u32 %v75, 4294901760
    %886 = vmatpush2.msra.mxu0 %v885
    %887 = vmatprep.subr.mxu0 0.0
    %v888 = vand.u32 %v74, 4294901760
    %889 = vmatpush2.msra.mxu0 %v888
    %890 = vmatprep.subr.mxu0 0.0
    %v891 = vand.u32 %v73, 4294901760
    %892 = vmatpush2.msra.mxu0 %v891
    %893 = vmatprep.subr.mxu0 0.0
    %v894 = vand.u32 %v72, 4294901760
    %895 = vmatpush2.msra.mxu0 %v894
    %896 = vmatprep.subr.mxu0 0.0
    %v897 = vand.u32 %v71, 4294901760
    %898 = vmatpush2.msra.mxu0 %v897
    %899 = vmatprep.subr.mxu0 0.0
    %v900 = vand.u32 %v70, 4294901760
    %901 = vmatpush2.msra.mxu0 %v900
    %902 = vmatprep.subr.mxu0 0.0
    %v903 = vand.u32 %v69, 4294901760
    %904 = vmatpush2.msra.mxu0 %v903
    %905 = vmatprep.subr.mxu0 0.0
    %v906 = vand.u32 %v68, 4294901760
    %907 = vmatpush2.msra.mxu0 %v906
    %908 = vmatprep.subr.mxu0 0.0
    %v909 = vand.u32 %v67, 4294901760
    %910 = vmatpush2.msra.mxu0 %v909
    %911 = vmatprep.subr.mxu0 0.0
    %v912 = vand.u32 %v66, 4294901760
    %913 = vmatpush2.msra.mxu0 %v912
    %914 = vmatprep.subr.mxu0 0.0
    %v915 = vand.u32 %v65, 4294901760
    %916 = vmatpush2.msra.mxu0 %v915
    %917 = vmatprep.subr.mxu0 0.0
    %v918 = vand.u32 %v64, 4294901760
    %919 = vmatpush2.msra.mxu0 %v918
    %920 = vmatprep.subr.mxu0 0.0
    %v921 = vand.u32 %v63, 4294901760
    %922 = vmatpush2.msra.mxu0 %v921
    %923 = vmatprep.subr.mxu0 0.0
    %v924 = vand.u32 %v62, 4294901760
    %925 = vmatpush2.msra.mxu0 %v924
    %926 = vmatprep.subr.mxu0 0.0
    %v927 = vand.u32 %v61, 4294901760
    %928 = vmatpush2.msra.mxu0 %v927
    %929 = vmatprep.subr.mxu0 0.0
    %v930 = vand.u32 %v60, 4294901760
    %931 = vmatpush2.msra.mxu0 %v930
    %v932 = vand.u32 %v43, 4294901760
    %933 = vmatprep.mubr.f32.mxu0 %v932
    %v934 = vand.u32 %v42, 4294901760
    %935 = vmatmul.mubr.f32.gmra.mxu0 %v934
    %v936 = vpop.f32.mrf.mxu0
    %v937 = vadd.f32 %v833, %v936
    %v938 = vpop.f32.mrf.mxu0
    %939 = vdwg.mxu0
    %940 = vst [vmem:[#allocation8] sm:$0xff] %v937
    // Predicated region
    $region22: #{tpu_custom_call.1} parent=1 // pred_check
      _
    $region23: #{tpu_custom_call.1} parent=1 // pred_check_branch
      %942 = sbr.rel (0) target = $region25
    $region24: #{tpu_custom_call.1} parent=1 // pred_region
      %s944 = ssub.s32 128, 128
      %945 = vsyncadd [#allocation5], %s944
      %s947 = sshll.u32 [#allocation8], 4
      %s948 = int_to_ptr.vmem [resolvable:$true] %s947
      %950 = dma.vmem_to_hbm [thread:$0]  %s948, 128, %s3, [#allocation5]
    $region25: #{tpu_custom_call.1} parent=1 // pred_fallthru
      _
    // Predicated region
    $region26: #{tpu_custom_call.1} parent=1 // pred_check
      _
    $region27: #{tpu_custom_call.1} parent=1 // pred_check_branch
      %952 = sbr.rel (0) target = $region29
    $region28: #{tpu_custom_call.1} parent=1 // pred_region
      %953 = dma.done [#allocation5], 128
    $region29: #{tpu_custom_call.1} parent=1 // pred_fallthru
      _
    %954 = vsyncpa [#allocation4], 1
    %955 = vsyncpa [#allocation7], 1
    %956 = vsyncpa [#allocation5], 1

</llo_original>
